<compile_context>
chip_gen: v7x
topology: tpu7x:2x2x1
jax: 0.10.0
libtpu: 0.0.40
codegen_flags: <defaults>
</compile_context>

<pallas_src>
import functools

import jax
import jax.numpy as jnp
from jax.experimental import pallas as pl
from jax.experimental.pallas import tpu as pltpu


_NEG_BIG = -1e30  # finite "minus infinity" so exp/max never produce NaN


def _round_up(x, m):
    return ((x + m - 1) // m) * m


def _cdiv(a, b):
    return -(-a // b)


def _balanced_tile(total, target, align):
    """Largest aligned tile <= target that minimizes padding of `total`."""
    tot_a = _round_up(max(int(total), 1), align)
    tile = min(_round_up(max(int(target), align), align), tot_a)
    n = _cdiv(tot_a, tile)
    tile = _round_up(_cdiv(tot_a, n), align)
    return tile, n, tile * n


def _device_kind():
    try:
        return jax.devices()[0].device_kind.lower()
    except Exception:
        return ""


def _has_bf16_eup(kind):
    # bf16 transcendental (EUP) path exists on v6e / v7x; v5e and earlier do
    # not — keep the safe f32 path when the generation is unknown.
    return any(tag in kind for tag in ("v6", "v7", "tpu7", "7x"))


def _vmem_capacity_bytes():
    try:
        info = pltpu.get_tpu_info()
        cap = int(getattr(info, "vmem_capacity_bytes", 0) or 0)
        if cap > 0:
            return cap
    except Exception:
        pass
    return 64 << 20  # conservative default: v7x per-core capacity


# ----------------------------------------------------------------------------
# Pallas kernel: vocab projection + online log_softmax + masked NLL
# (LanguageModelCriterion), tiled over rows (parallel) and vocab (reduction).
# ----------------------------------------------------------------------------
def _lm_criterion_kernel(h_ref, w_ref, tgt_ref, mask_ref, out_ref,
                         m_sc, l_sc, tl_sc, *, vocab_size, tile_v,
                         vocab_padded, exp_bf16):
    v = pl.program_id(1)
    last_v = pl.num_programs(1) - 1

    @pl.when(v == 0)
    def _():
        m_sc[...] = jnp.full_like(m_sc, _NEG_BIG)
        l_sc[...] = jnp.zeros_like(l_sc)
        tl_sc[...] = jnp.zeros_like(tl_sc)

    # [TM, H](bf16) @ [H, TV](bf16) -> [TM, TV] f32 accumulation on the MXU.
    logits = jnp.dot(h_ref[...], w_ref[...], preferred_element_type=jnp.float32)

    # Global vocab column index of each lane in this vocab tile.
    col = v * tile_v + jax.lax.broadcasted_iota(jnp.int32, logits.shape, 1)

    # Target-token logit gather: valid targets are always < vocab_size, so
    # padded columns (col >= vocab_size) can never match; no padding mask
    # needed here.  (Out-of-range targets silently contribute 0, unlike
    # torch.gather which would error.)
    tgt = tgt_ref[...]                                             # [TM, 1] int32
    tl_sc[...] += jnp.sum(jnp.where(col == tgt, logits, 0.0),
                          axis=-1, keepdims=True)                  # [TM, 1]

    def _lse_update(lg):
        # Online logsumexp over the vocab (lane) axis.
        m_prev = m_sc[...]
        m_new = jnp.maximum(m_prev, jnp.max(lg, axis=-1, keepdims=True))
        if exp_bf16:
            # bf16 EUP path (v6e/v7x): ~2x exp throughput; accumulate in f32.
            p = jnp.exp((lg - m_new).astype(jnp.bfloat16)).astype(jnp.float32)
        else:
            p = jnp.exp(lg - m_new)
        l_sc[...] = (l_sc[...] * jnp.exp(m_prev - m_new)
                     + jnp.sum(p, axis=-1, keepdims=True))
        m_sc[...] = m_new

    if vocab_padded:
        # Padding columns only exist in the last vocab tile: skip the
        # full-tile compare+select everywhere else.
        @pl.when(v != last_v)
        def _():
            _lse_update(logits)

        @pl.when(v == last_v)
        def _():
            _lse_update(jnp.where(col < vocab_size, logits, _NEG_BIG))
    else:
        _lse_update(logits)

    # Finalize once per row tile: per-row masked NLL and mask count
    # (single merged store).
    @pl.when(v == last_v)
    def _():
        lse = m_sc[...] + jnp.log(l_sc[...])                       # [TM, 1]
        tgt_lp = tl_sc[...] - lse                                  # [TM, 1]
        mask = mask_ref[...]                                       # [TM, 1] f32
        out_ref[...] = jnp.concatenate((-tgt_lp * mask, mask), axis=-1)


def language_model_criterion(h, w_out, target, mask, *, tile_m=None, tile_v=None):
    """loss = -sum(logprobs.gather(target) * mask) / sum(mask)  (PyTorch semantics)."""
    M, H = h.shape
    V = w_out.shape[1]

    kind = _device_kind()
    vmem_cap = _vmem_capacity_bytes()
    big_vmem = vmem_cap >= (96 << 20)          # v5e/v6e: 128 MiB; v7x: 64 MiB
    exp_bf16 = _has_bf16_eup(kind)

    # Generation-aware tile targets (user override via kwargs still honored).
    #   tile_m is the weight-reuse / arithmetic-intensity lever.
    #   tile_v only changes per-step VMEM + step overhead, not HBM traffic.
    if tile_m is None:
        tile_m = 1024 if big_vmem else 512
    if tile_v is None:
        tile_v = 2048 if big_vmem else 1024

    tile_m, n_row, Mp = _balanced_tile(M, tile_m, 8)
    tile_v, n_v, Vp = _balanced_tile(V, tile_v, 128)

    # VMEM budget: leave headroom below physical capacity for compiler scratch.
    budget = max(32 << 20, vmem_cap - (16 << 20))

    # Deepen the streamed-weight pipeline only on 128-MiB parts with enough
    # vocab tiles to benefit.
    n_wbuf = 3 if (big_vmem and n_v >= 3) else 2

    def vmem_est(tm, tv, nw):
        return (2 * tm * H * 2             # h tile (bf16), double-buffered
                + nw * H * tv * 2          # w slab (bf16), n-buffered
                + 6 * tm * tv * 4          # live full-tile temporaries: logits,
                                           #   masked copy, int32 iota, target
                                           #   select, exp tile, slack
                + 4 * tm * 128 * 4         # scratch accumulators / output (lane-padded)
                + (2 << 20))

    # Shrink tile_v first (free w.r.t. weight traffic), then the deep
    # pipeline, then tile_m.
    while vmem_est(tile_m, tile_v, n_wbuf) > budget and tile_v > 512:
        tile_v, n_v, Vp = _balanced_tile(V, tile_v // 2, 128)
    while vmem_est(tile_m, tile_v, n_wbuf) > budget and n_wbuf > 2:
        n_wbuf -= 1
    while vmem_est(tile_m, tile_v, n_wbuf) > budget and tile_m > 256:
        tile_m, n_row, Mp = _balanced_tile(M, tile_m // 2, 8)
    if n_v < 3:
        n_wbuf = 2

    vocab_padded = bool(Vp != V)

    # bf16 matmul operands (halves HBM traffic / VMEM footprint; f32 accumulate).
    h_b = h.astype(jnp.bfloat16)
    w_b = w_out.astype(jnp.bfloat16)
    if Mp != M:
        h_b = jnp.pad(h_b, ((0, Mp - M), (0, 0)))
    if Vp != V:
        w_b = jnp.pad(w_b, ((0, 0), (0, Vp - V)))

    tgt2d = target.reshape(M, 1).astype(jnp.int32)
    mask2d = mask.reshape(M, 1).astype(jnp.float32)
    if Mp != M:
        tgt2d = jnp.pad(tgt2d, ((0, Mp - M), (0, 0)))
        mask2d = jnp.pad(mask2d, ((0, Mp - M), (0, 0)))  # padded rows: mask 0

    vmem_limit = int(budget)

    cost = pl.CostEstimate(
        flops=2 * Mp * H * Vp,
        transcendentals=Mp * Vp,
        bytes_accessed=Mp * H * 2 + n_row * H * Vp * 2 + Mp * 4 * 2 + Mp * 2 * 4,
    )

    kernel = functools.partial(_lm_criterion_kernel,
                               vocab_size=V, tile_v=tile_v,
                               vocab_padded=vocab_padded, exp_bf16=exp_bf16)

    w_index_map = lambda i, v: (0, v)
    if n_wbuf > 2:
        try:
            w_spec = pl.BlockSpec((H, tile_v), w_index_map,
                                  pipeline_mode=pl.Buffered(n_wbuf))
        except (TypeError, AttributeError):
            w_spec = pl.BlockSpec((H, tile_v), w_index_map)
    else:
        w_spec = pl.BlockSpec((H, tile_v), w_index_map)

    # Per-row partial [-logprob(tgt)*mask, mask]; reduced outside the kernel,
    # so the "parallel" row axis is race-free on megacore.
    per_row = pl.pallas_call(
        kernel,
        out_shape=jax.ShapeDtypeStruct((Mp, 2), jnp.float32),
        grid_spec=pltpu.PrefetchScalarGridSpec(
            num_scalar_prefetch=0,
            grid=(n_row, n_v),
            in_specs=[
                pl.BlockSpec((tile_m, H), lambda i, v: (i, 0)),      # hidden rows
                w_spec,                                              # vocab slab
                pl.BlockSpec((tile_m, 1), lambda i, v: (i, 0)),      # targets
                pl.BlockSpec((tile_m, 1), lambda i, v: (i, 0)),      # mask
            ],
            out_specs=pl.BlockSpec((tile_m, 2), lambda i, v: (i, 0)),
            scratch_shapes=[
                pltpu.VMEM((tile_m, 1), jnp.float32),   # running max m
                pltpu.VMEM((tile_m, 1), jnp.float32),   # running sum l
                pltpu.VMEM((tile_m, 1), jnp.float32),   # target logit
            ],
        ),
        compiler_params=pltpu.CompilerParams(
            dimension_semantics=("parallel", "arbitrary"),
            vmem_limit_bytes=vmem_limit,
        ),
        cost_estimate=cost,
    )(h_b, w_b, tgt2d, mask2d)

    # Matches PyTorch LanguageModelCriterion (no epsilon guard: all-zero mask -> NaN).
    return jnp.sum(per_row[:, 0]) / jnp.sum(per_row[:, 1])


# ----------------------------------------------------------------------------
# Synthetic captioning "model" (glue JAX): produces hidden states for the
# teacher-forced sequence labels[..., :-1].
# ----------------------------------------------------------------------------
def model_hidden(params, fc_feats, att_feats, seq, att_masks):
    emb = params["embed"][seq]                                     # [B, T, H]
    fc_h = fc_feats @ params["w_fc"]                               # [B, H]
    att_w = att_masks[..., None].astype(att_feats.dtype)           # [B, Natt, 1]
    att_pool = (att_feats * att_w).sum(axis=1) / jnp.clip(
        att_w.sum(axis=1), 1.0)                                    # [B, Datt]
    att_h = att_pool @ params["w_att"]                             # [B, H]
    h = jnp.tanh(emb + fc_h[:, None, :] + att_h[:, None, :])       # [B, T, H]
    return h


class LossWrapper:
    """JAX/Pallas port of captioning LossWrapper (LM-criterion training path)."""

    def __init__(self, params, opt):
        self.params = params
        self.opt = opt
        # opt['label_smoothing'] == 0 -> LanguageModelCriterion (implemented).
        assert opt["label_smoothing"] == 0
        # TODO(synk): LabelSmoothing / StructureLosses / RewardCriterion+SCST reward
        # paths require sampling + CIDEr scorers with no clean Pallas equivalent.

    def forward(self, fc_feats, att_feats, labels, masks, att_masks,
                gts, gt_indices, sc_flag, struc_flag, sim_gts=None, gts_btw=None,
                **crit_kwargs):
        assert (sim_gts is None and gts_btw is None), \
            "CIDErBtw reward path not implemented"
        assert not sc_flag and not struc_flag, \
            "Only the language-model criterion path is implemented"

        out = {}
        B, Tp1 = labels.shape
        T = Tp1 - 1
        H = self.params["w_out"].shape[0]

        # model(fc_feats, att_feats, labels[..., :-1], att_masks)
        h = model_hidden(self.params, fc_feats, att_feats,
                         labels[..., :-1], att_masks)              # [B, T, H]

        # crit(logprobs, labels[..., 1:], masks[..., 1:]) — projection,
        # log_softmax, gather and masked-mean all inside the Pallas kernel.
        loss = language_model_criterion(
            h.reshape(B * T, H),
            self.params["w_out"],
            labels[..., 1:].reshape(-1),
            masks[..., 1:].reshape(-1),
            **crit_kwargs,
        )
        out["loss"] = loss
        return out


# ----------------------------------------------------------------------------
# Pure-JAX (f32) reference for a correctness sanity check.
# ----------------------------------------------------------------------------
def _reference_loss(params, fc_feats, att_feats, labels, masks, att_masks):
    B, Tp1 = labels.shape
    h = model_hidden(params, fc_feats, att_feats, labels[..., :-1], att_masks)
    logits = h.reshape(B * (Tp1 - 1), -1) @ params["w_out"]
    logprobs = jax.nn.log_softmax(logits, axis=-1)
    tgt = labels[..., 1:].reshape(-1)
    msk = masks[..., 1:].reshape(-1).astype(jnp.float32)
    nll = -jnp.take_along_axis(logprobs, tgt[:, None], axis=1)[:, 0]
    return jnp.sum(nll * msk) / jnp.sum(msk)


if __name__ == "__main__":
    # Small, deterministic shapes.  V is intentionally NOT a multiple of 128
    # so the gated vocab-padding-mask path (last vocab tile only) is exercised.
    B, T, H, V = 2, 8, 32, 250      # labels have length T+1 = 9
    D_FC, N_ATT, D_ATT = 64, 4, 64

    key = jax.random.PRNGKey(0)
    k = jax.random.split(key, 8)

    params = {
        "embed": 0.1 * jax.random.normal(k[0], (V, H), jnp.float32),
        "w_fc":  0.1 * jax.random.normal(k[1], (D_FC, H), jnp.float32),
        "w_att": 0.1 * jax.random.normal(k[2], (D_ATT, H), jnp.float32),
        "w_out": 0.1 * jax.random.normal(k[3], (H, V), jnp.float32),
    }

    fc_feats = jax.random.normal(k[4], (B, D_FC), jnp.float32)
    att_feats = jax.random.normal(k[5], (B, N_ATT, D_ATT), jnp.float32)
    att_masks = jnp.ones((B, N_ATT), jnp.float32)
    labels = jax.random.randint(k[6], (B, T + 1), 1, V, jnp.int32)
    masks = jnp.concatenate(
        [jnp.ones((B, T), jnp.float32), jnp.zeros((B, 1), jnp.float32)], axis=1)

    # Unused in the implemented path (kept to match the module signature).
    gts = [labels[b:b + 1, 1:] for b in range(B)]
    gt_indices = jnp.arange(B, dtype=jnp.int32)

    opt = {"label_smoothing": 0, "structure_loss_weight": 0.0}
    wrapper = LossWrapper(params, opt)

    # Default (generation-aware, large) tiles — single row/vocab tile at these
    # toy shapes.
    out = wrapper.forward(fc_feats, att_feats, labels, masks, att_masks,
                          gts, gt_indices, sc_flag=False, struc_flag=False)
    loss = jax.block_until_ready(out["loss"])

    # Small tiles — exercises the multi-tile online-logsumexp reduction path
    # (2 row tiles x 2 vocab tiles) plus the last-tile padding mask.
    out_tiled = wrapper.forward(fc_feats, att_feats, labels, masks, att_masks,
                                gts, gt_indices, sc_flag=False, struc_flag=False,
                                tile_m=8, tile_v=128)
    loss_tiled = jax.block_until_ready(out_tiled["loss"])

    ref = jax.block_until_ready(
        _reference_loss(params, fc_feats, att_feats, labels, masks, att_masks))

    # bf16 MXU operands (and possibly bf16 exp) -> looser tolerance vs the
    # f32 reference.
    assert jnp.allclose(loss, ref, rtol=2e-2, atol=2e-2), (loss, ref)
    assert jnp.allclose(loss_tiled, ref, rtol=2e-2, atol=2e-2), (loss_tiled, ref)
    assert jnp.allclose(loss, loss_tiled, rtol=1e-3, atol=1e-3), (loss, loss_tiled)

    print("KERNEL_OK")
</pallas_src>

<mosaic_0001>
module attributes {stable_mosaic.version = 11 : i64} {
  func.func @_lm_criterion_kernel(%arg0: i32, %arg1: i32, %arg2: memref<16x32xbf16, #tpu.memory_space<vmem>>, %arg3: memref<32x256xbf16, #tpu.memory_space<vmem>>, %arg4: memref<16x1xi32, #tpu.memory_space<vmem>>, %arg5: memref<16x1xf32, #tpu.memory_space<vmem>>, %arg6: memref<16x2xf32, #tpu.memory_space<vmem>>, %arg7: memref<16x1xf32, #tpu.memory_space<vmem>>, %arg8: memref<16x1xf32, #tpu.memory_space<vmem>>, %arg9: memref<16x1xf32, #tpu.memory_space<vmem>>) attributes {dimension_semantics = [#tpu.dimension_semantics<parallel>, #tpu.dimension_semantics<arbitrary>], iteration_bounds = array<i64: 1, 1>, scalar_prefetch = 0 : i64, scratch_operands = 3 : i64, tpu.core_type = #tpu.core_type<tc>, window_params = [{transform_indices = @transform_0, window_bounds = array<i64: 16, 32>}, {transform_indices = @transform_1, window_bounds = array<i64: 32, 256>}, {transform_indices = @transform_2, window_bounds = array<i64: 16, 1>}, {transform_indices = @transform_3, window_bounds = array<i64: 16, 1>}, {transform_indices = @transform_4, window_bounds = array<i64: 16, 2>}]} {
    %c0_i32 = arith.constant 0 : i32
    %0 = arith.cmpi eq, %arg1, %c0_i32 : i32
    %1 = arith.extui %0 : i1 to i32
    %c0_i32_0 = arith.constant 0 : i32
    %2 = arith.cmpi ne, %1, %c0_i32_0 : i32
    scf.if %2 {
      %cst_18 = arith.constant -1.000000e+30 : f32
      %29 = vector.broadcast %cst_18 : f32 to vector<16x1xf32>
      %c0_19 = arith.constant 0 : index
      %c0_20 = arith.constant 0 : index
      %30 = vector.load %arg7[%c0_19, %c0_20] : memref<16x1xf32, #tpu.memory_space<vmem>>, vector<16x1xf32>
      tpu.vector_store %arg7[%c0_19, %c0_20], %29 {strides = array<i32>} : memref<16x1xf32, #tpu.memory_space<vmem>>, vector<16x1xf32>,
      %cst_21 = arith.constant 0.000000e+00 : f32
      %31 = vector.broadcast %cst_21 : f32 to vector<16x1xf32>
      %c0_22 = arith.constant 0 : index
      %c0_23 = arith.constant 0 : index
      %32 = vector.load %arg8[%c0_22, %c0_23] : memref<16x1xf32, #tpu.memory_space<vmem>>, vector<16x1xf32>
      tpu.vector_store %arg8[%c0_22, %c0_23], %31 {strides = array<i32>} : memref<16x1xf32, #tpu.memory_space<vmem>>, vector<16x1xf32>,
      %cst_24 = arith.constant 0.000000e+00 : f32
      %33 = vector.broadcast %cst_24 : f32 to vector<16x1xf32>
      %c0_25 = arith.constant 0 : index
      %c0_26 = arith.constant 0 : index
      %34 = vector.load %arg9[%c0_25, %c0_26] : memref<16x1xf32, #tpu.memory_space<vmem>>, vector<16x1xf32>
      tpu.vector_store %arg9[%c0_25, %c0_26], %33 {strides = array<i32>} : memref<16x1xf32, #tpu.memory_space<vmem>>, vector<16x1xf32>,
    } else {
    }
    %c0 = arith.constant 0 : index
    %c0_1 = arith.constant 0 : index
    %3 = vector.load %arg2[%c0, %c0_1] : memref<16x32xbf16, #tpu.memory_space<vmem>>, vector<16x32xbf16>
    %c0_2 = arith.constant 0 : index
    %c0_3 = arith.constant 0 : index
    %4 = vector.load %arg3[%c0_2, %c0_3] : memref<32x256xbf16, #tpu.memory_space<vmem>>, vector<32x256xbf16>
    %cst = arith.constant dense<0.000000e+00> : vector<16x256xf32>
    %5 = tpu.matmul %3, %4, %cst {dimension_numbers = #tpu.dot_dimension_numbers<[1], [0], [0], [1], [0, 0, 1, 1], [], []>} : vector<16x32xbf16>, vector<32x256xbf16>, vector<16x256xf32> -> vector<16x256xf32>
    %c256_i32 = arith.constant 256 : i32
    %6 = arith.muli %arg1, %c256_i32 : i32
    %7 = tpu.iota {dimensions = array<i32: 1>} : vector<16x256xi32>
    %8 = vector.broadcast %6 : i32 to vector<16x256xi32>
    %9 = arith.addi %8, %7 : vector<16x256xi32>
    %c0_4 = arith.constant 0 : index
    %c0_5 = arith.constant 0 : index
    %10 = vector.load %arg4[%c0_4, %c0_5] : memref<16x1xi32, #tpu.memory_space<vmem>>, vector<16x1xi32>
    %c0_6 = arith.constant 0 : index
    %c0_7 = arith.constant 0 : index
    %11 = vector.load %arg9[%c0_6, %c0_7] : memref<16x1xf32, #tpu.memory_space<vmem>>, vector<16x1xf32>
    %12 = vector.broadcast %10 : vector<16x1xi32> to vector<16x256xi32>
    %13 = arith.cmpi eq, %9, %12 : vector<16x256xi32>
    %cst_8 = arith.constant 0.000000e+00 : f32
    %14 = vector.broadcast %cst_8 : f32 to vector<16x256xf32>
    %15 = arith.select %13, %5, %14 : vector<16x256xi1>, vector<16x256xf32>
    %cst_9 = arith.constant dense<0.000000e+00> : vector<16xf32>
    %16 = vector.multi_reduction <add>, %15, %cst_9 [1] : vector<16x256xf32> to vector<16xf32>
    %17 = vector.shape_cast %16 : vector<16xf32> to vector<16x1xf32>
    %18 = arith.addf %11, %17 : vector<16x1xf32>
    %c0_10 = arith.constant 0 : index
    %c0_11 = arith.constant 0 : index
    %19 = vector.load %arg9[%c0_10, %c0_11] : memref<16x1xf32, #tpu.memory_space<vmem>>, vector<16x1xf32>
    tpu.vector_store %arg9[%c0_10, %c0_11], %18 {strides = array<i32>} : memref<16x1xf32, #tpu.memory_space<vmem>>, vector<16x1xf32>,
    %c0_i32_12 = arith.constant 0 : i32
    %20 = arith.cmpi ne, %arg1, %c0_i32_12 : i32
    %21 = arith.extui %20 : i1 to i32
    %c0_i32_13 = arith.constant 0 : i32
    %22 = arith.cmpi ne, %21, %c0_i32_13 : i32
    scf.if %22 {
      %c0_18 = arith.constant 0 : index
      %c0_19 = arith.constant 0 : index
      %29 = vector.load %arg7[%c0_18, %c0_19] : memref<16x1xf32, #tpu.memory_space<vmem>>, vector<16x1xf32>
      %cst_20 = arith.constant dense<0xFF800000> : vector<16xf32>
      %30 = vector.multi_reduction <maximumf>, %5, %cst_20 [1] : vector<16x256xf32> to vector<16xf32>
      %31 = vector.shape_cast %30 : vector<16xf32> to vector<16x1xf32>
      %32 = arith.maximumf %29, %31 : vector<16x1xf32>
      %33 = vector.broadcast %32 : vector<16x1xf32> to vector<16x256xf32>
      %34 = arith.subf %5, %33 : vector<16x256xf32>
      %35 = math.exp %34 : vector<16x256xf32>
      %c0_21 = arith.constant 0 : index
      %c0_22 = arith.constant 0 : index
      %36 = vector.load %arg8[%c0_21, %c0_22] : memref<16x1xf32, #tpu.memory_space<vmem>>, vector<16x1xf32>
      %37 = arith.subf %29, %32 : vector<16x1xf32>
      %38 = math.exp %37 : vector<16x1xf32>
      %39 = arith.mulf %36, %38 : vector<16x1xf32>
      %cst_23 = arith.constant dense<0.000000e+00> : vector<16xf32>
      %40 = vector.multi_reduction <add>, %35, %cst_23 [1] : vector<16x256xf32> to vector<16xf32>
      %41 = vector.shape_cast %40 : vector<16xf32> to vector<16x1xf32>
      %42 = arith.addf %39, %41 : vector<16x1xf32>
      %c0_24 = arith.constant 0 : index
      %c0_25 = arith.constant 0 : index
      %43 = vector.load %arg8[%c0_24, %c0_25] : memref<16x1xf32, #tpu.memory_space<vmem>>, vector<16x1xf32>
      tpu.vector_store %arg8[%c0_24, %c0_25], %42 {strides = array<i32>} : memref<16x1xf32, #tpu.memory_space<vmem>>, vector<16x1xf32>,
      %c0_26 = arith.constant 0 : index
      %c0_27 = arith.constant 0 : index
      %44 = vector.load %arg7[%c0_26, %c0_27] : memref<16x1xf32, #tpu.memory_space<vmem>>, vector<16x1xf32>
      tpu.vector_store %arg7[%c0_26, %c0_27], %32 {strides = array<i32>} : memref<16x1xf32, #tpu.memory_space<vmem>>, vector<16x1xf32>,
    } else {
    }
    %c0_i32_14 = arith.constant 0 : i32
    %23 = arith.cmpi eq, %arg1, %c0_i32_14 : i32
    %24 = arith.extui %23 : i1 to i32
    %c0_i32_15 = arith.constant 0 : i32
    %25 = arith.cmpi ne, %24, %c0_i32_15 : i32
    scf.if %25 {
      %c250_i32 = arith.constant 250 : i32
      %29 = vector.broadcast %c250_i32 : i32 to vector<16x256xi32>
      %30 = arith.cmpi slt, %9, %29 : vector<16x256xi32>
      %cst_18 = arith.constant -1.000000e+30 : f32
      %31 = vector.broadcast %cst_18 : f32 to vector<16x256xf32>
      %32 = arith.select %30, %5, %31 : vector<16x256xi1>, vector<16x256xf32>
      %c0_19 = arith.constant 0 : index
      %c0_20 = arith.constant 0 : index
      %33 = vector.load %arg7[%c0_19, %c0_20] : memref<16x1xf32, #tpu.memory_space<vmem>>, vector<16x1xf32>
      %cst_21 = arith.constant dense<0xFF800000> : vector<16xf32>
      %34 = vector.multi_reduction <maximumf>, %32, %cst_21 [1] : vector<16x256xf32> to vector<16xf32>
      %35 = vector.shape_cast %34 : vector<16xf32> to vector<16x1xf32>
      %36 = arith.maximumf %33, %35 : vector<16x1xf32>
      %37 = vector.broadcast %36 : vector<16x1xf32> to vector<16x256xf32>
      %38 = arith.subf %32, %37 : vector<16x256xf32>
      %39 = math.exp %38 : vector<16x256xf32>
      %c0_22 = arith.constant 0 : index
      %c0_23 = arith.constant 0 : index
      %40 = vector.load %arg8[%c0_22, %c0_23] : memref<16x1xf32, #tpu.memory_space<vmem>>, vector<16x1xf32>
      %41 = arith.subf %33, %36 : vector<16x1xf32>
      %42 = math.exp %41 : vector<16x1xf32>
      %43 = arith.mulf %40, %42 : vector<16x1xf32>
      %cst_24 = arith.constant dense<0.000000e+00> : vector<16xf32>
      %44 = vector.multi_reduction <add>, %39, %cst_24 [1] : vector<16x256xf32> to vector<16xf32>
      %45 = vector.shape_cast %44 : vector<16xf32> to vector<16x1xf32>
      %46 = arith.addf %43, %45 : vector<16x1xf32>
      %c0_25 = arith.constant 0 : index
      %c0_26 = arith.constant 0 : index
      %47 = vector.load %arg8[%c0_25, %c0_26] : memref<16x1xf32, #tpu.memory_space<vmem>>, vector<16x1xf32>
      tpu.vector_store %arg8[%c0_25, %c0_26], %46 {strides = array<i32>} : memref<16x1xf32, #tpu.memory_space<vmem>>, vector<16x1xf32>,
      %c0_27 = arith.constant 0 : index
      %c0_28 = arith.constant 0 : index
      %48 = vector.load %arg7[%c0_27, %c0_28] : memref<16x1xf32, #tpu.memory_space<vmem>>, vector<16x1xf32>
      tpu.vector_store %arg7[%c0_27, %c0_28], %36 {strides = array<i32>} : memref<16x1xf32, #tpu.memory_space<vmem>>, vector<16x1xf32>,
    } else {
    }
    %c0_i32_16 = arith.constant 0 : i32
    %26 = arith.cmpi eq, %arg1, %c0_i32_16 : i32
    %27 = arith.extui %26 : i1 to i32
    %c0_i32_17 = arith.constant 0 : i32
    %28 = arith.cmpi ne, %27, %c0_i32_17 : i32
    scf.if %28 {
      %c0_18 = arith.constant 0 : index
      %c0_19 = arith.constant 0 : index
      %29 = vector.load %arg7[%c0_18, %c0_19] : memref<16x1xf32, #tpu.memory_space<vmem>>, vector<16x1xf32>
      %c0_20 = arith.constant 0 : index
      %c0_21 = arith.constant 0 : index
      %30 = vector.load %arg8[%c0_20, %c0_21] : memref<16x1xf32, #tpu.memory_space<vmem>>, vector<16x1xf32>
      %31 = math.log %30 : vector<16x1xf32>
      %32 = arith.addf %29, %31 : vector<16x1xf32>
      %c0_22 = arith.constant 0 : index
      %c0_23 = arith.constant 0 : index
      %33 = vector.load %arg9[%c0_22, %c0_23] : memref<16x1xf32, #tpu.memory_space<vmem>>, vector<16x1xf32>
      %34 = arith.subf %33, %32 : vector<16x1xf32>
      %c0_24 = arith.constant 0 : index
      %c0_25 = arith.constant 0 : index
      %35 = vector.load %arg5[%c0_24, %c0_25] : memref<16x1xf32, #tpu.memory_space<vmem>>, vector<16x1xf32>
      %cst_26 = arith.constant 0.000000e+00 : f32
      %36 = vector.broadcast %cst_26 : f32 to vector<16x1xf32>
      %37 = arith.subf %36, %34 : vector<16x1xf32>
      %38 = arith.mulf %37, %35 : vector<16x1xf32>
      %39 = tpu.concatenate %38, %35 in 1 : vector<16x1xf32>, vector<16x1xf32> -> vector<16x2xf32>
      %c0_27 = arith.constant 0 : index
      %c0_28 = arith.constant 0 : index
      %40 = vector.load %arg6[%c0_27, %c0_28] : memref<16x2xf32, #tpu.memory_space<vmem>>, vector<16x2xf32>
      tpu.vector_store %arg6[%c0_27, %c0_28], %39 {strides = array<i32>} : memref<16x2xf32, #tpu.memory_space<vmem>>, vector<16x2xf32>,
    } else {
    }
    return
  }
  func.func @transform_0(%arg0: i32, %arg1: i32) -> (i32, i32) {
    %c0_i32 = arith.constant 0 : i32
    %c0_i32_0 = arith.constant 0 : i32
    return %arg0, %c0_i32 : i32, i32
  }
  func.func @transform_1(%arg0: i32, %arg1: i32) -> (i32, i32) {
    %c0_i32 = arith.constant 0 : i32
    %c0_i32_0 = arith.constant 0 : i32
    return %c0_i32, %arg1 : i32, i32
  }
  func.func @transform_2(%arg0: i32, %arg1: i32) -> (i32, i32) {
    %c0_i32 = arith.constant 0 : i32
    %c0_i32_0 = arith.constant 0 : i32
    return %arg0, %c0_i32 : i32, i32
  }
  func.func @transform_3(%arg0: i32, %arg1: i32) -> (i32, i32) {
    %c0_i32 = arith.constant 0 : i32
    %c0_i32_0 = arith.constant 0 : i32
    return %arg0, %c0_i32 : i32, i32
  }
  func.func @transform_4(%arg0: i32, %arg1: i32) -> (i32, i32) {
    %c0_i32 = arith.constant 0 : i32
    %c0_i32_0 = arith.constant 0 : i32
    return %arg0, %c0_i32 : i32, i32
  }
}

</mosaic_0001>

<llo_original>
// kernel: tpu_custom_call.1
$region0: #{tpu_custom_call.1}
  #allocation0 [shape = 'u32[]', space=smem, size = 0x4, offset = 0x4, fixed_abs, tag = 'smem constant byte address 0x4 - core index']
  #allocation1 [shape = 'u32[144,128]{1,0:T(1,128)}', space=vmem, size = 0x12000, scoped, tag = 'internal scratch']
  #allocation2 [shape = 'f32[16,1]{1,0:T(8,128)}', space=vmem, size = 0x2000, scoped, tag = 'scratch operand']
  #allocation3 [shape = 'f32[16,1]{1,0:T(8,128)}', space=vmem, size = 0x2000, scoped, tag = 'scratch operand']
  #allocation4 [shape = 'f32[16,1]{1,0:T(8,128)}', space=vmem, size = 0x2000, scoped, tag = 'scratch operand']
  %s0 = inlined_call_operand.hbm [shape: bf16[16,32], index: 0, kind: input, shape index: {}]
  %s1 = inlined_call_operand.vmem [shape: bf16[32,256], index: 1, kind: input, shape index: {}]
  %s2 = inlined_call_operand.vmem [shape: s32[16,1], index: 2, kind: input, shape index: {}]
  %s3 = inlined_call_operand.vmem [shape: f32[16,1], index: 3, kind: input, shape index: {}]
  %s4 = inlined_call_operand.vmem [shape: f32[16,2], index: 4, kind: output, shape index: {}]
  %s5 = sld [smem:[#allocation0]]
  $region42: #{tpu_custom_call.1} parent=0
    _
  %s7 = ssub.s32 1, %s5
  %s8 = scalar_select 0, %s7, %s5
  $region1: #{tpu_custom_call.1} parent=0
    #allocation5 [shape = 'u8[4096]{0}', space=vmem, size = 0x1000, scoped, tag = 'input window, operand 0, single buffered']
    #allocation6 [shape = 's32[1]{0}', space=sflag, size = 0x4, scoped, tag = 'scoped memory for tpu_custom_call.1']
    %9 = vsyncpa [#allocation6], 0
    // Predicated region
    $region2: #{tpu_custom_call.1} parent=1 // pred_check
      _
    $region3: #{tpu_custom_call.1} parent=1 // pred_check_branch
      %11 = sbr.rel (0) target = $region5
    $region4: #{tpu_custom_call.1} parent=1 // pred_region
      %s13 = ssub.s32 128, 128
      %14 = vsyncadd [#allocation6], %s13
      %s15 = sshll.u32 [#allocation5], 4
      %s16 = int_to_ptr.vmem [resolvable:$true] %s15
      %21 = dma.hbm_to_vmem [thread:$0]  %s0, 128, %s16, [#allocation6], 64, 64, 4
    $region5: #{tpu_custom_call.1} parent=1 // pred_fallthru
      _
    // Predicated region
    $region6: #{tpu_custom_call.1} parent=1 // pred_check
      _
    $region7: #{tpu_custom_call.1} parent=1 // pred_check_branch
      %23 = sbr.rel (0) target = $region9
    $region8: #{tpu_custom_call.1} parent=1 // pred_region
      _
    $region9: #{tpu_custom_call.1} parent=1 // pred_fallthru
      _
    // Predicated region
    $region10: #{tpu_custom_call.1} parent=1 // pred_check
      _
    $region11: #{tpu_custom_call.1} parent=1 // pred_check_branch
      %25 = sbr.rel (0) target = $region13
    $region12: #{tpu_custom_call.1} parent=1 // pred_region
      _
    $region13: #{tpu_custom_call.1} parent=1 // pred_fallthru
      _
    // Predicated region
    $region14: #{tpu_custom_call.1} parent=1 // pred_check
      _
    $region15: #{tpu_custom_call.1} parent=1 // pred_check_branch
      %27 = sbr.rel (0) target = $region17
    $region16: #{tpu_custom_call.1} parent=1 // pred_region
      _
    $region17: #{tpu_custom_call.1} parent=1 // pred_fallthru
      _
    // Predicated region
    $region18: #{tpu_custom_call.1} parent=1 // pred_check
      _
    $region19: #{tpu_custom_call.1} parent=1 // pred_check_branch
      %29 = sbr.rel (0) target = $region21
    $region20: #{tpu_custom_call.1} parent=1 // pred_region
      %30 = dma.done [#allocation6], 128
    $region21: #{tpu_custom_call.1} parent=1 // pred_fallthru
      _
    %p32 = scmp.eq.s32.totalorder 0, 0
    // Predicated region
    $region22: #{tpu_custom_call.1} parent=1 // pred_check
      %p33 = pneg %p32
    $region23: #{tpu_custom_call.1} parent=1 // pred_check_branch
      %35 = sbr.rel (%p33) target = $region25
    $region24: #{tpu_custom_call.1} parent=1 // pred_region
      %vm36 = vcmask 7168
      %37 = vst.msk [vmem:[#allocation2] sm:$0xff] %vm36, -1e+30
      %38 = vst.msk [vmem:[#allocation2 + $0x8] sm:$0xff] %vm36, -1e+30
      %39 = vst.msk [vmem:[#allocation3] sm:$0xff] %vm36, 0.0
      %40 = vst.msk [vmem:[#allocation3 + $0x8] sm:$0xff] %vm36, 0.0
      %41 = vst.msk [vmem:[#allocation4] sm:$0xff] %vm36, 0.0
      %42 = vst.msk [vmem:[#allocation4 + $0x8] sm:$0xff] %vm36, 0.0
    $region25: #{tpu_custom_call.1} parent=1 // pred_fallthru
      _
    %v43 = vld [vmem:[#allocation5] sm:$0xf]
    %v44 = vld [vmem:[#allocation5 + $0x4] sm:$0xf]
    %v45 = vld [vmem:[%s1] sm:$0xff]
    %v46 = vld [vmem:[%s1 + $0x8] sm:$0xff]
    %v47 = vld [vmem:[%s1 + $0x10] sm:$0xff]
    %v48 = vld [vmem:[%s1 + $0x18] sm:$0xff]
    %v51 = vunpack.c.l.b16 %v43
    %v52 = vunpack.c.l.b16 %v44
    %v53 = vpack.c.b16 %v52, %v51
    %v58 = vunpack.c.l.b16 %v45
    %v59 = vunpack.c.h.b16 %v45
    %v60 = vunpack.c.l.b16 %v46
    %v61 = vunpack.c.h.b16 %v46
    %v62 = vunpack.c.l.b16 %v47
    %v63 = vunpack.c.h.b16 %v47
    %v64 = vunpack.c.l.b16 %v48
    %v65 = vunpack.c.h.b16 %v48
    %v66 = vpack.c.b16 %v60, %v58
    %v67 = vpack.c.b16 %v61, %v59
    %v68 = vpack.c.b16 %v64, %v62
    %v69 = vpack.c.b16 %v65, %v63
    %vm74 = vcmask 261120
    %v76 = vsel %vm74, %v53, 0
    %78 = vmatprep.subr.bf16.mxu0 %v67
    %79 = vmatpush1.bf16.msra.mxu0 %v66
    %80 = vmatprep.subr.bf16.mxu0 %v69
    %81 = vmatpush1.bf16.msra.mxu0 %v68
    %82 = vmatprep.subr.bf16.mxu0 0
    %83 = vmatpush1.bf16.msra.mxu0 0
    %84 = vmatprep.subr.bf16.mxu0 0
    %85 = vmatpush1.bf16.msra.mxu0 0
    %86 = vmatprep.subr.bf16.mxu0 0
    %87 = vmatpush1.bf16.msra.mxu0 0
    %88 = vmatprep.subr.bf16.mxu0 0
    %89 = vmatpush1.bf16.msra.mxu0 0
    %90 = vmatprep.subr.bf16.mxu0 0
    %91 = vmatpush1.bf16.msra.mxu0 0
    %92 = vmatprep.subr.bf16.mxu0 0
    %93 = vmatpush1.bf16.msra.mxu0 0
    %94 = vmatprep.subr.bf16.mxu0 0
    %95 = vmatpush1.bf16.msra.mxu0 0
    %96 = vmatprep.subr.bf16.mxu0 0
    %97 = vmatpush1.bf16.msra.mxu0 0
    %98 = vmatprep.subr.bf16.mxu0 0
    %99 = vmatpush1.bf16.msra.mxu0 0
    %100 = vmatprep.subr.bf16.mxu0 0
    %101 = vmatpush1.bf16.msra.mxu0 0
    %102 = vmatprep.subr.bf16.mxu0 0
    %103 = vmatpush1.bf16.msra.mxu0 0
    %104 = vmatprep.subr.bf16.mxu0 0
    %105 = vmatpush1.bf16.msra.mxu0 0
    %106 = vmatprep.subr.bf16.mxu0 0
    %107 = vmatpush1.bf16.msra.mxu0 0
    %108 = vmatprep.subr.bf16.mxu0 0
    %109 = vmatpush1.bf16.msra.mxu0 0
    %110 = vmatprep.mubr.bf16.mxu0 0
    %111 = vmatmul.mubr.bf16.gmra.mrb[0].mxu0 %v76
    %v112 = vpop.f32.mrb[0].mxu0
    %v113 = vadd.f32 0.0, %v112
    %v114 = vpop.f32.mrb[0].mxu0
    %v115 = vadd.f32 0.0, %v114
    %v116 = vpop.f32.mrb[0].mxu0
    %v117 = vadd.f32 0.0, %v116
    %v118 = vpop.f32.mrb[0].mxu0
    %v119 = vadd.f32 0.0, %v118
    %120 = vdwg.mxu0
    %s121 = smul.u32 0, 256
    %v122 = vlaneseq
    %v123 = vand.u32 %v122, 127
    %v124 = vadd.s32 %v123, 128
    %v125 = vstv %s121
    %v126 = vadd.s32 %v125, %v123
    %v127 = vadd.s32 %v125, %v124
    %v128 = vld [vmem:[%s2] sm:$0xff]
    %v129 = vld [vmem:[%s2 + $0x8] sm:$0xff]
    %v130 = vld [vmem:[#allocation4] sm:$0xff]
    %v131 = vld [vmem:[#allocation4 + $0x8] sm:$0xff]
    %132 = vset.pattern.permute.xlu0 0
    %133 = vperm.xlu0 %132, %v128
    %v134 = vpop.permute.xlu0 %133
    %135 = vset.pattern.permute.xlu0 0
    %136 = vperm.xlu0 %135, %v129
    %v137 = vpop.permute.xlu0 %136
    %vm138 = vcmp.eq.s32.totalorder %v126, %v134
    %vm139 = vcmp.eq.s32.totalorder %v127, %v134
    %vm140 = vcmp.eq.s32.totalorder %v126, %v137
    %vm141 = vcmp.eq.s32.totalorder %v127, %v137
    %v142 = vsel %vm138, %v113, 0.0
    %v143 = vsel %vm139, %v115, 0.0
    %v144 = vsel %vm140, %v117, 0.0
    %v145 = vsel %vm141, %v119, 0.0
    %v146 = vadd.f32 %v142, %v143
    %147 = vadd.xlane.f32.xlu0 %v146
    %v148 = vpop.xlane.xlu0 %147
    %v149 = vadd.f32 %v144, %v145
    %150 = vadd.xlane.f32.xlu0 %v149
    %v151 = vpop.xlane.xlu0 %150
    %v152 = vadd.f32 %v130, %v148
    %v153 = vadd.f32 %v131, %v151
    %vm154 = vcmask 7168
    %155 = vst.msk [vmem:[#allocation4] sm:$0xff] %vm154, %v152
    %156 = vst.msk [vmem:[#allocation4 + $0x8] sm:$0xff] %vm154, %v153
    %p157 = scmp.ne.s32.totalorder 0, 0
    // Predicated region
    $region26: #{tpu_custom_call.1} parent=1 // pred_check
      %p158 = pneg %p157
    $region27: #{tpu_custom_call.1} parent=1 // pred_check_branch
      %160 = sbr.rel (%p158) target = $region29
    $region28: #{tpu_custom_call.1} parent=1 // pred_region
      %v161 = vld [vmem:[#allocation2] sm:$0xff]
      %v162 = vld [vmem:[#allocation2 + $0x8] sm:$0xff]
      %v163 = vmax.f32 %v113, %v115
      %164 = vmax.xlane.f32.xlu0 %v163
      %v165 = vpop.xlane.xlu0 %164
      %v166 = vmax.f32 %v117, %v119
      %167 = vmax.xlane.f32.xlu0 %v166
      %v168 = vpop.xlane.xlu0 %167
      %v169 = vmax.f32 %v161, %v165
      %v170 = vmax.f32 %v162, %v168
      %172 = vset.pattern.permute.xlu0 0
      %173 = vperm.xlu0 %172, %v169
      %v174 = vpop.permute.xlu0 %173
      %177 = vset.pattern.permute.xlu0 0
      %178 = vperm.xlu0 %177, %v170
      %v179 = vpop.permute.xlu0 %178
      %v181 = vsub.f32 %v113, %v174
      %v182 = vsub.f32 %v115, %v174
      %v183 = vsub.f32 %v117, %v179
      %v184 = vsub.f32 %v119, %v179
      %v185 = vmul.f32 %v181, 1.442695
      %v186 = vpow.pop %v185
      %v187 = vmul.f32 %v182, 1.442695
      %v188 = vpow.pop %v187
      %v189 = vmul.f32 %v183, 1.442695
      %v190 = vpow.pop %v189
      %v191 = vmul.f32 %v184, 1.442695
      %v192 = vpow.pop %v191
      %v193 = vld [vmem:[#allocation3] sm:$0xff]
      %v194 = vld [vmem:[#allocation3 + $0x8] sm:$0xff]
      %v195 = vsub.f32 %v161, %v169
      %v196 = vsub.f32 %v162, %v170
      %v197 = vmul.f32 %v195, 1.442695
      %v198 = vpow.pop %v197
      %v199 = vmul.f32 %v196, 1.442695
      %v200 = vpow.pop %v199
      %v201 = vmul.f32 %v193, %v198
      %v202 = vmul.f32 %v194, %v200
      %v203 = vadd.f32 %v186, %v188
      %204 = vadd.xlane.f32.xlu0 %v203
      %v205 = vpop.xlane.xlu0 %204
      %v206 = vadd.f32 %v190, %v192
      %207 = vadd.xlane.f32.xlu0 %v206
      %v208 = vpop.xlane.xlu0 %207
      %v209 = vadd.f32 %v201, %v205
      %v210 = vadd.f32 %v202, %v208
      %211 = vst.msk [vmem:[#allocation3] sm:$0xff] %vm154, %v209
      %212 = vst.msk [vmem:[#allocation3 + $0x8] sm:$0xff] %vm154, %v210
      %213 = vst.msk [vmem:[#allocation2] sm:$0xff] %vm154, %v169
      %214 = vst.msk [vmem:[#allocation2 + $0x8] sm:$0xff] %vm154, %v170
    $region29: #{tpu_custom_call.1} parent=1 // pred_fallthru
      _
    // Predicated region
    $region30: #{tpu_custom_call.1} parent=1 // pred_check
      %p215 = pneg %p32
    $region31: #{tpu_custom_call.1} parent=1 // pred_check_branch
      %217 = sbr.rel (%p215) target = $region33
    $region32: #{tpu_custom_call.1} parent=1 // pred_region
      %vm218 = vcmp.lt.s32.totalorder %v126, 250
      %vm219 = vcmp.lt.s32.totalorder %v127, 250
      %v220 = vsel %vm218, %v113, -1e+30
      %v221 = vsel %vm219, %v115, -1e+30
      %v222 = vsel %vm218, %v117, -1e+30
      %v223 = vsel %vm219, %v119, -1e+30
      %v224 = vld [vmem:[#allocation2] sm:$0xff]
      %v225 = vld [vmem:[#allocation2 + $0x8] sm:$0xff]
      %v226 = vmax.f32 %v220, %v221
      %227 = vmax.xlane.f32.xlu0 %v226
      %v228 = vpop.xlane.xlu0 %227
      %v229 = vmax.f32 %v222, %v223
      %230 = vmax.xlane.f32.xlu0 %v229
      %v231 = vpop.xlane.xlu0 %230
      %v232 = vmax.f32 %v224, %v228
      %v233 = vmax.f32 %v225, %v231
      %235 = vset.pattern.permute.xlu0 0
      %236 = vperm.xlu0 %235, %v232
      %v237 = vpop.permute.xlu0 %236
      %240 = vset.pattern.permute.xlu0 0
      %241 = vperm.xlu0 %240, %v233
      %v242 = vpop.permute.xlu0 %241
      %v244 = vsub.f32 %v220, %v237
      %v245 = vsub.f32 %v221, %v237
      %v246 = vsub.f32 %v222, %v242
      %v247 = vsub.f32 %v223, %v242
      %v248 = vmul.f32 %v244, 1.442695
      %v249 = vpow.pop %v248
      %v250 = vmul.f32 %v245, 1.442695
      %v251 = vpow.pop %v250
      %v252 = vmul.f32 %v246, 1.442695
      %v253 = vpow.pop %v252
      %v254 = vmul.f32 %v247, 1.442695
      %v255 = vpow.pop %v254
      %v256 = vld [vmem:[#allocation3] sm:$0xff]
      %v257 = vld [vmem:[#allocation3 + $0x8] sm:$0xff]
      %v258 = vsub.f32 %v224, %v232
      %v259 = vsub.f32 %v225, %v233
      %v260 = vmul.f32 %v258, 1.442695
      %v261 = vpow.pop %v260
      %v262 = vmul.f32 %v259, 1.442695
      %v263 = vpow.pop %v262
      %v264 = vmul.f32 %v256, %v261
      %v265 = vmul.f32 %v257, %v263
      %v266 = vadd.f32 %v249, %v251
      %267 = vadd.xlane.f32.xlu0 %v266
      %v268 = vpop.xlane.xlu0 %267
      %v269 = vadd.f32 %v253, %v255
      %270 = vadd.xlane.f32.xlu0 %v269
      %v271 = vpop.xlane.xlu0 %270
      %v272 = vadd.f32 %v264, %v268
      %v273 = vadd.f32 %v265, %v271
      %274 = vst.msk [vmem:[#allocation3] sm:$0xff] %vm154, %v272
      %275 = vst.msk [vmem:[#allocation3 + $0x8] sm:$0xff] %vm154, %v273
      %276 = vst.msk [vmem:[#allocation2] sm:$0xff] %vm154, %v232
      %277 = vst.msk [vmem:[#allocation2 + $0x8] sm:$0xff] %vm154, %v233
      %v278 = vld [vmem:[#allocation2] sm:$0xff]
      %v279 = vld [vmem:[#allocation2 + $0x8] sm:$0xff]
      %v280 = vld [vmem:[#allocation3] sm:$0xff]
      %v281 = vld [vmem:[#allocation3 + $0x8] sm:$0xff]
      %v282 = vlog2.pop %v280
      %v283 = vmul.f32 %v282, 0.6931472
      %v284 = vlog2.pop %v281
      %v285 = vmul.f32 %v284, 0.6931472
      %v286 = vadd.f32 %v278, %v283
      %v287 = vadd.f32 %v279, %v285
      %v288 = vld [vmem:[#allocation4] sm:$0xff]
      %v289 = vld [vmem:[#allocation4 + $0x8] sm:$0xff]
      %v290 = vsub.f32 %v288, %v286
      %v291 = vsub.f32 %v289, %v287
      %v292 = vld [vmem:[%s3] sm:$0xff]
      %v293 = vld [vmem:[%s3 + $0x8] sm:$0xff]
      %v294 = vsub.f32 0.0, %v290
      %v295 = vsub.f32 0.0, %v291
      %v296 = vmul.f32 %v294, %v292
      %v297 = vmul.f32 %v295, %v293
      %300 = vrot.lane.b32.xlu0 %v292, 1
      %v301 = vpop.permute.xlu0 %300
      %302 = vrot.lane.b32.xlu0 %v293, 1
      %v303 = vpop.permute.xlu0 %302
      %v306 = vsel %vm154, %v296, %v301
      %v307 = vsel %vm154, %v297, %v303
      %vm308 = vcmask 15360
      %309 = vst.msk [vmem:[%s4] sm:$0xff] %vm308, %v306
      %310 = vst.msk [vmem:[%s4 + $0x8] sm:$0xff] %vm308, %v307
    $region33: #{tpu_custom_call.1} parent=1 // pred_fallthru
      _
    // Predicated region
    $region34: #{tpu_custom_call.1} parent=1 // pred_check
      _
    $region35: #{tpu_custom_call.1} parent=1 // pred_check_branch
      %312 = sbr.rel (0) target = $region37
    $region36: #{tpu_custom_call.1} parent=1 // pred_region
      _
    $region37: #{tpu_custom_call.1} parent=1 // pred_fallthru
      _
    // Predicated region
    $region38: #{tpu_custom_call.1} parent=1 // pred_check
      _
    $region39: #{tpu_custom_call.1} parent=1 // pred_check_branch
      %314 = sbr.rel (0) target = $region41
    $region40: #{tpu_custom_call.1} parent=1 // pred_region
      _
    $region41: #{tpu_custom_call.1} parent=1 // pred_fallthru
      _
    %315 = vsyncpa [#allocation6], 1

</llo_original>
